<compile_context>
chip_gen: v5e
topology: v5e:2x2
jax: 0.10.0
libtpu: 0.0.40
codegen_flags: <defaults>
</compile_context>

<pallas_src>
import functools

import numpy as np
import jax
import jax.numpy as jnp
from jax import lax
from jax.experimental import pallas as pl
from jax.experimental.pallas import tpu as pltpu


def _vamp_s_kernel(s_kernel_ref, sigma_ref, v_ref, c00_ref, c01_ref, c11_ref,
                   vampe_ref, k_ref, s_ref, *, renorm):
    f32 = jnp.float32

    # kernel_w = exp(S_kernel_) on the EUP;  W1 = kernel_w + kernel_w.T (symmetric).
    kernel_w = jnp.exp(s_kernel_ref[...].astype(f32))
    W1 = kernel_w + kernel_w.T                                    # (M, M)

    # v arrives lane-dense as a (1, M) row.  norm[i] = sum_j W1[i,j] * v[j]
    # computed as VPU multiply + XLU lane-reduce (no MXU pass for a matvec).
    v_row = v_ref[...].astype(f32)                                # (1, M)
    norm = jnp.sum(W1 * v_row, axis=1, keepdims=True)             # (M, 1)

    if renorm:
        # (W1 / q) @ v == (W1 @ v) / q in real arithmetic; rescaling `norm`
        # directly instead of re-doing the matvec differs by ~1 ulp.
        inv_q = 1.0 / jnp.max(jnp.abs(norm))
        W1 = W1 * inv_q
        norm = norm * inv_q

    # S = W1 + diag((1 - norm) / v).  Broadcast (M,1)/(1,M) -> (M,M); only the
    # diagonal entries, which equal (1 - norm[i]) / v[i], are kept by the mask.
    M = W1.shape[0]
    row = lax.broadcasted_iota(jnp.int32, (M, M), 0)
    col = lax.broadcasted_iota(jnp.int32, (M, M), 1)
    diag_vals = (1.0 - norm) / v_row                              # (M, M)
    S = W1 + jnp.where(row == col, diag_vals, 0.0)

    # Store S as soon as it is formed (don't bunch all stores in the epilogue).
    s_ref[...] = S.astype(s_ref.dtype)

    # Independent MXU work: K = S @ Sigma can overlap with the VampE chain.
    K = jnp.dot(S, sigma_ref[...].astype(f32), preferred_element_type=f32)
    k_ref[...] = K.astype(k_ref.dtype)

    # S.T @ X with the transpose folded into the contraction (no explicit S.T).
    def t_dot(a, b):
        return lax.dot_general(a, b, (((0,), (0,)), ((), ())),
                               preferred_element_type=f32)

    u = t_dot(S, c01_ref[...].astype(f32))                        # S.T @ C_01
    t0 = t_dot(S, c00_ref[...].astype(f32))                       # S.T @ C_00
    t1 = jnp.dot(t0, S, preferred_element_type=f32)               # (S.T C00) S
    t2 = jnp.dot(t1, c11_ref[...].astype(f32),
                 preferred_element_type=f32)                      # ... @ C_11
    vampe_ref[...] = (t2 - 2.0 * u).astype(vampe_ref.dtype)


def vamp_s_forward(s_kernel, sigma, v, c00, c01, c11, *, renorm=True):
    """Pallas implementation of vamp_S.forward with weight_transformation=exp."""
    M = s_kernel.shape[0]
    f32 = jnp.float32

    # Lane-dense (1, M) layout for the vector (avoids masked lane-sparse loads).
    v_row = jnp.reshape(v, (1, M)).astype(f32)

    # No grid: whole problem lives in VMEM as full-array blocks.
    # ~12 live (M,M) f32 arrays ≈ 48*M^2 bytes -> fine for M up to a few hundred
    # on all generations; a K-tiled grid path would be needed if M approached
    # ~1024 (v7x has only 64 MiB physical VMEM).
    vmem_spec = pl.BlockSpec(memory_space=pltpu.MemorySpace.VMEM)

    out_shapes = (
        jax.ShapeDtypeStruct((M, M), f32),  # VampE_matrix
        jax.ShapeDtypeStruct((M, M), f32),  # K
        jax.ShapeDtypeStruct((M, M), f32),  # S
    )
    # TODO(synk): if this op is ever applied per-batch/per-head, add a leading
    # "parallel" batch grid axis so v7x's two TensorCores split the work.
    return pl.pallas_call(
        functools.partial(_vamp_s_kernel, renorm=renorm),
        out_shape=out_shapes,
        in_specs=[vmem_spec] * 6,
        out_specs=(vmem_spec, vmem_spec, vmem_spec),
    )(s_kernel.astype(f32), sigma.astype(f32), v_row,
      c00.astype(f32), c01.astype(f32), c11.astype(f32))


def _reference(s_kernel, sigma, v, c00, c01, c11, renorm=True):
    """Pure-JAX reference mirroring the PyTorch forward."""
    kernel_w = jnp.exp(s_kernel)
    W1 = kernel_w + kernel_w.T
    norm = W1 @ v
    if renorm:
        W1 = W1 / jnp.max(jnp.abs(norm))
        norm = W1 @ v
    w2 = (1.0 - jnp.squeeze(norm)) / jnp.squeeze(v)
    S = W1 + jnp.diag(w2)
    vampe = S.T @ c00 @ S @ c11 - 2.0 * (S.T @ c01)
    K = S @ sigma
    return vampe, K, S


if __name__ == "__main__":
    M = 32  # output_dim

    # Deterministic parameter init, matching nn.Parameter(ones * 0.1)
    s_kernel = jnp.ones((M, M), dtype=jnp.float32) * 0.1

    key = jax.random.PRNGKey(0)
    k1, k2, k3, k4, k5 = jax.random.split(key, 5)
    sigma = jax.random.normal(k1, (M, M), dtype=jnp.float32)
    # v appears as a divisor -> keep it strictly positive
    v = jnp.abs(jax.random.normal(k2, (M, 1), dtype=jnp.float32)) + 0.1
    c00 = jax.random.normal(k3, (M, M), dtype=jnp.float32)
    c01 = jax.random.normal(k4, (M, M), dtype=jnp.float32)
    c11 = jax.random.normal(k5, (M, M), dtype=jnp.float32)

    vampe, K, S = vamp_s_forward(s_kernel, sigma, v, c00, c01, c11, renorm=True)
    jax.block_until_ready((vampe, K, S))

    vampe_r, K_r, S_r = _reference(s_kernel, sigma, v, c00, c01, c11, renorm=True)
    # Renorm rescaling + VPU matvec differ from the reference by a few ulps of
    # the (pre-renorm) norm, hence the slightly looser atol on S / VampE.
    np.testing.assert_allclose(np.asarray(S), np.asarray(S_r), rtol=1e-5, atol=3e-5)
    np.testing.assert_allclose(np.asarray(K), np.asarray(K_r), rtol=1e-4, atol=1e-4)
    np.testing.assert_allclose(np.asarray(vampe), np.asarray(vampe_r), rtol=1e-4, atol=2e-4)

    print("KERNEL_OK")
</pallas_src>

<mosaic_0001>
module attributes {stable_mosaic.version = 11 : i64} {
  func.func @_vamp_s_kernel(%arg0: memref<32x32xf32, #tpu.memory_space<vmem>>, %arg1: memref<32x32xf32, #tpu.memory_space<vmem>>, %arg2: memref<1x32xf32, #tpu.memory_space<vmem>>, %arg3: memref<32x32xf32, #tpu.memory_space<vmem>>, %arg4: memref<32x32xf32, #tpu.memory_space<vmem>>, %arg5: memref<32x32xf32, #tpu.memory_space<vmem>>, %arg6: memref<32x32xf32, #tpu.memory_space<vmem>>, %arg7: memref<32x32xf32, #tpu.memory_space<vmem>>, %arg8: memref<32x32xf32, #tpu.memory_space<vmem>>) attributes {dimension_semantics = [], scalar_prefetch = 0 : i64, scratch_operands = 0 : i64, tpu.core_type = #tpu.core_type<tc>} {
    %c0 = arith.constant 0 : index
    %c0_0 = arith.constant 0 : index
    %0 = vector.load %arg0[%c0, %c0_0] : memref<32x32xf32, #tpu.memory_space<vmem>>, vector<32x32xf32>
    %1 = math.exp %0 : vector<32x32xf32>
    %2 = tpu.transpose %1, [1, 0] : vector<32x32xf32> -> vector<32x32xf32>
    %3 = arith.addf %1, %2 : vector<32x32xf32>
    %c0_1 = arith.constant 0 : index
    %c0_2 = arith.constant 0 : index
    %4 = vector.load %arg2[%c0_1, %c0_2] : memref<1x32xf32, #tpu.memory_space<vmem>>, vector<1x32xf32>
    %5 = vector.broadcast %4 : vector<1x32xf32> to vector<32x32xf32>
    %6 = arith.mulf %3, %5 : vector<32x32xf32>
    %cst = arith.constant dense<0.000000e+00> : vector<32xf32>
    %7 = vector.multi_reduction <add>, %6, %cst [1] : vector<32x32xf32> to vector<32xf32>
    %8 = vector.shape_cast %7 : vector<32xf32> to vector<32x1xf32>
    %9 = math.absf %8 : vector<32x1xf32>
    %10 = vector.shape_cast %9 : vector<32x1xf32> to vector<1x32x1xf32>
    %cst_3 = arith.constant dense<0xFF800000> : vector<1xf32>
    %11 = vector.multi_reduction <maximumf>, %10, %cst_3 [1, 2] : vector<1x32x1xf32> to vector<1xf32>
    %12 = vector.shape_cast %11 : vector<1xf32> to vector<1x1x1xf32>
    %13 = vector.extract %12[0, 0, 0] : f32 from vector<1x1x1xf32>
    %cst_4 = arith.constant 1.000000e+00 : f32
    %14 = arith.divf %cst_4, %13 : f32
    %15 = vector.broadcast %14 : f32 to vector<32x32xf32>
    %16 = arith.mulf %3, %15 : vector<32x32xf32>
    %17 = vector.broadcast %14 : f32 to vector<32x1xf32>
    %18 = arith.mulf %8, %17 : vector<32x1xf32>
    %19 = tpu.iota {dimensions = array<i32: 0>} : vector<32x32xi32>
    %20 = tpu.iota {dimensions = array<i32: 1>} : vector<32x32xi32>
    %cst_5 = arith.constant 1.000000e+00 : f32
    %21 = vector.broadcast %cst_5 : f32 to vector<32x1xf32>
    %22 = arith.subf %21, %18 : vector<32x1xf32>
    %23 = vector.broadcast %22 : vector<32x1xf32> to vector<32x32xf32>
    %24 = vector.broadcast %4 : vector<1x32xf32> to vector<32x32xf32>
    %25 = arith.divf %23, %24 : vector<32x32xf32>
    %26 = arith.cmpi eq, %19, %20 : vector<32x32xi32>
    %cst_6 = arith.constant 0.000000e+00 : f32
    %27 = vector.broadcast %cst_6 : f32 to vector<32x32xf32>
    %28 = arith.select %26, %25, %27 : vector<32x32xi1>, vector<32x32xf32>
    %29 = arith.addf %16, %28 : vector<32x32xf32>
    %c0_7 = arith.constant 0 : index
    %c0_8 = arith.constant 0 : index
    %30 = vector.load %arg8[%c0_7, %c0_8] : memref<32x32xf32, #tpu.memory_space<vmem>>, vector<32x32xf32>
    tpu.vector_store %arg8[%c0_7, %c0_8], %29 {strides = array<i32>} : memref<32x32xf32, #tpu.memory_space<vmem>>, vector<32x32xf32>,
    %c0_9 = arith.constant 0 : index
    %c0_10 = arith.constant 0 : index
    %31 = vector.load %arg1[%c0_9, %c0_10] : memref<32x32xf32, #tpu.memory_space<vmem>>, vector<32x32xf32>
    %cst_11 = arith.constant dense<0.000000e+00> : vector<32x32xf32>
    %32 = tpu.matmul %29, %31, %cst_11 {dimension_numbers = #tpu.dot_dimension_numbers<[1], [0], [0], [1], [0, 0, 1, 1], [], []>} : vector<32x32xf32>, vector<32x32xf32>, vector<32x32xf32> -> vector<32x32xf32>
    %c0_12 = arith.constant 0 : index
    %c0_13 = arith.constant 0 : index
    %33 = vector.load %arg7[%c0_12, %c0_13] : memref<32x32xf32, #tpu.memory_space<vmem>>, vector<32x32xf32>
    tpu.vector_store %arg7[%c0_12, %c0_13], %32 {strides = array<i32>} : memref<32x32xf32, #tpu.memory_space<vmem>>, vector<32x32xf32>,
    %c0_14 = arith.constant 0 : index
    %c0_15 = arith.constant 0 : index
    %34 = vector.load %arg4[%c0_14, %c0_15] : memref<32x32xf32, #tpu.memory_space<vmem>>, vector<32x32xf32>
    %cst_16 = arith.constant dense<0.000000e+00> : vector<32x32xf32>
    %35 = tpu.matmul %29, %34, %cst_16 {dimension_numbers = #tpu.dot_dimension_numbers<[0], [0], [1], [1], [0, 1, 1, 1], [], []>} : vector<32x32xf32>, vector<32x32xf32>, vector<32x32xf32> -> vector<32x32xf32>
    %c0_17 = arith.constant 0 : index
    %c0_18 = arith.constant 0 : index
    %36 = vector.load %arg3[%c0_17, %c0_18] : memref<32x32xf32, #tpu.memory_space<vmem>>, vector<32x32xf32>
    %cst_19 = arith.constant dense<0.000000e+00> : vector<32x32xf32>
    %37 = tpu.matmul %29, %36, %cst_19 {dimension_numbers = #tpu.dot_dimension_numbers<[0], [0], [1], [1], [0, 1, 1, 1], [], []>} : vector<32x32xf32>, vector<32x32xf32>, vector<32x32xf32> -> vector<32x32xf32>
    %cst_20 = arith.constant dense<0.000000e+00> : vector<32x32xf32>
    %38 = tpu.matmul %37, %29, %cst_20 {dimension_numbers = #tpu.dot_dimension_numbers<[1], [0], [0], [1], [0, 0, 1, 1], [], []>} : vector<32x32xf32>, vector<32x32xf32>, vector<32x32xf32> -> vector<32x32xf32>
    %c0_21 = arith.constant 0 : index
    %c0_22 = arith.constant 0 : index
    %39 = vector.load %arg5[%c0_21, %c0_22] : memref<32x32xf32, #tpu.memory_space<vmem>>, vector<32x32xf32>
    %cst_23 = arith.constant dense<0.000000e+00> : vector<32x32xf32>
    %40 = tpu.matmul %38, %39, %cst_23 {dimension_numbers = #tpu.dot_dimension_numbers<[1], [0], [0], [1], [0, 0, 1, 1], [], []>} : vector<32x32xf32>, vector<32x32xf32>, vector<32x32xf32> -> vector<32x32xf32>
    %cst_24 = arith.constant 2.000000e+00 : f32
    %41 = vector.broadcast %cst_24 : f32 to vector<32x32xf32>
    %42 = arith.mulf %41, %35 : vector<32x32xf32>
    %43 = arith.subf %40, %42 : vector<32x32xf32>
    %c0_25 = arith.constant 0 : index
    %c0_26 = arith.constant 0 : index
    %44 = vector.load %arg6[%c0_25, %c0_26] : memref<32x32xf32, #tpu.memory_space<vmem>>, vector<32x32xf32>
    tpu.vector_store %arg6[%c0_25, %c0_26], %43 {strides = array<i32>} : memref<32x32xf32, #tpu.memory_space<vmem>>, vector<32x32xf32>,
    return
  }
}

</mosaic_0001>

<llo_original>
// kernel: tpu_custom_call.1
$region0: #{tpu_custom_call.1}
  #allocation0 [shape = 'u32[]', space=smem, size = 0x4, offset = 0x4, fixed_abs, tag = 'smem constant byte address 0x4 - core index']
  #allocation1 [shape = 'u32[72,128]{1,0:T(1,128)}', space=vmem, size = 0x9000, scoped, tag = 'internal scratch']
  %s0 = inlined_call_operand.hbm [shape: f32[32,32], index: 0, kind: input, shape index: {}]
  %s1 = inlined_call_operand.hbm [shape: f32[32,32], index: 1, kind: input, shape index: {}]
  %s2 = inlined_call_operand.vmem [shape: f32[1,32], index: 2, kind: input, shape index: {}]
  %s3 = inlined_call_operand.hbm [shape: f32[32,32], index: 3, kind: input, shape index: {}]
  %s4 = inlined_call_operand.hbm [shape: f32[32,32], index: 4, kind: input, shape index: {}]
  %s5 = inlined_call_operand.hbm [shape: f32[32,32], index: 5, kind: input, shape index: {}]
  %s6 = inlined_call_operand.hbm [shape: f32[32,32], index: 6, kind: output, shape index: {0}]
  %s7 = inlined_call_operand.hbm [shape: f32[32,32], index: 7, kind: output, shape index: {1}]
  %s8 = inlined_call_operand.hbm [shape: f32[32,32], index: 8, kind: output, shape index: {2}]
  %9 = xla_tuple %s6, %s7, %s8
  %s10 = sld [smem:[#allocation0]]
  $region70: #{tpu_custom_call.1} parent=0
    _
  %s12 = ssub.s32 1, %s10
  %s13 = scalar_select 0, %s12, %s10
  $region1: #{tpu_custom_call.1} parent=0
    #allocation2 [shape = 'u8[16384]{0}', space=vmem, size = 0x4000, scoped, tag = 'input window, operand 0, single buffered']
    #allocation3 [shape = 's32[1]{0}', space=sflag, size = 0x4, scoped, tag = 'scoped memory for tpu_custom_call.1']
    #allocation4 [shape = 's32[1]{0}', space=sflag, size = 0x4, scoped, tag = 'scoped memory for tpu_custom_call.1']
    #allocation5 [shape = 'u8[16384]{0}', space=vmem, size = 0x4000, scoped, tag = 'input window, operand 1, single buffered']
    #allocation6 [shape = 's32[1]{0}', space=sflag, size = 0x4, scoped, tag = 'scoped memory for tpu_custom_call.1']
    #allocation7 [shape = 'u8[16384]{0}', space=vmem, size = 0x4000, scoped, tag = 'input window, operand 3, single buffered']
    #allocation8 [shape = 'u8[16384]{0}', space=vmem, size = 0x4000, scoped, tag = 'input window, operand 4, single buffered']
    #allocation9 [shape = 's32[1]{0}', space=sflag, size = 0x4, scoped, tag = 'scoped memory for tpu_custom_call.1']
    #allocation10 [shape = 'u8[16384]{0}', space=vmem, size = 0x4000, scoped, tag = 'input window, operand 5, single buffered']
    #allocation11 [shape = 'u8[16384]{0}', space=vmem, size = 0x4000, scoped, tag = 'output window, operand 0, single buffered']
    #allocation12 [shape = 'u8[16384]{0}', space=vmem, size = 0x4000, scoped, tag = 'output window, operand 1, single buffered']
    #allocation13 [shape = 's32[1]{0}', space=sflag, size = 0x4, scoped, tag = 'scoped memory for tpu_custom_call.1']
    #allocation14 [shape = 'u8[16384]{0}', space=vmem, size = 0x4000, scoped, tag = 'output window, operand 2, single buffered']
    %14 = vsyncpa [#allocation3], 0
    %15 = vsyncpa [#allocation6], 0
    %16 = vsyncpa [#allocation9], 0
    %17 = vsyncpa [#allocation4], 0
    %18 = vsyncpa [#allocation13], 0
    // Predicated region
    $region2: #{tpu_custom_call.1} parent=1 // pred_check
      _
    $region3: #{tpu_custom_call.1} parent=1 // pred_check_branch
      %20 = sbr.rel (0) target = $region5
    $region4: #{tpu_custom_call.1} parent=1 // pred_region
      %22 = vsyncadd [#allocation3], 0
      %s23 = sshll.u32 %s0, 4
      %s24 = int_to_ptr.hbm [resolvable:$true] %s23
      %s25 = sshll.u32 [#allocation2], 4
      %s26 = int_to_ptr.vmem [resolvable:$true] %s25
      %31 = dma.hbm_to_vmem [thread:$0]  %s24, 512, %s26, [#allocation3], 128, 128, 8
    $region5: #{tpu_custom_call.1} parent=1 // pred_fallthru
      _
    // Predicated region
    $region6: #{tpu_custom_call.1} parent=1 // pred_check
      _
    $region7: #{tpu_custom_call.1} parent=1 // pred_check_branch
      %33 = sbr.rel (0) target = $region9
    $region8: #{tpu_custom_call.1} parent=1 // pred_region
      %35 = vsyncadd [#allocation6], 0
      %s36 = sshll.u32 %s1, 4
      %s37 = int_to_ptr.hbm [resolvable:$true] %s36
      %s38 = sshll.u32 [#allocation5], 4
      %s39 = int_to_ptr.vmem [resolvable:$true] %s38
      %44 = dma.hbm_to_vmem [thread:$0]  %s37, 512, %s39, [#allocation6], 128, 128, 8
    $region9: #{tpu_custom_call.1} parent=1 // pred_fallthru
      _
    // Predicated region
    $region10: #{tpu_custom_call.1} parent=1 // pred_check
      _
    $region11: #{tpu_custom_call.1} parent=1 // pred_check_branch
      %46 = sbr.rel (0) target = $region13
    $region12: #{tpu_custom_call.1} parent=1 // pred_region
      _
    $region13: #{tpu_custom_call.1} parent=1 // pred_fallthru
      _
    // Predicated region
    $region14: #{tpu_custom_call.1} parent=1 // pred_check
      _
    $region15: #{tpu_custom_call.1} parent=1 // pred_check_branch
      %48 = sbr.rel (0) target = $region17
    $region16: #{tpu_custom_call.1} parent=1 // pred_region
      %50 = vsyncadd [#allocation6], 0
      %s51 = sshll.u32 %s3, 4
      %s52 = int_to_ptr.hbm [resolvable:$true] %s51
      %s53 = sshll.u32 [#allocation7], 4
      %s54 = int_to_ptr.vmem [resolvable:$true] %s53
      %59 = dma.hbm_to_vmem [thread:$0]  %s52, 512, %s54, [#allocation6], 128, 128, 8
    $region17: #{tpu_custom_call.1} parent=1 // pred_fallthru
      _
    // Predicated region
    $region18: #{tpu_custom_call.1} parent=1 // pred_check
      _
    $region19: #{tpu_custom_call.1} parent=1 // pred_check_branch
      %61 = sbr.rel (0) target = $region21
    $region20: #{tpu_custom_call.1} parent=1 // pred_region
      %63 = vsyncadd [#allocation9], 0
      %s64 = sshll.u32 %s4, 4
      %s65 = int_to_ptr.hbm [resolvable:$true] %s64
      %s66 = sshll.u32 [#allocation8], 4
      %s67 = int_to_ptr.vmem [resolvable:$true] %s66
      %72 = dma.hbm_to_vmem [thread:$0]  %s65, 512, %s67, [#allocation9], 128, 128, 8
    $region21: #{tpu_custom_call.1} parent=1 // pred_fallthru
      _
    // Predicated region
    $region22: #{tpu_custom_call.1} parent=1 // pred_check
      _
    $region23: #{tpu_custom_call.1} parent=1 // pred_check_branch
      %74 = sbr.rel (0) target = $region25
    $region24: #{tpu_custom_call.1} parent=1 // pred_region
      %76 = vsyncadd [#allocation9], 0
      %s77 = sshll.u32 %s5, 4
      %s78 = int_to_ptr.hbm [resolvable:$true] %s77
      %s79 = sshll.u32 [#allocation10], 4
      %s80 = int_to_ptr.vmem [resolvable:$true] %s79
      %85 = dma.hbm_to_vmem [thread:$0]  %s78, 512, %s80, [#allocation9], 128, 128, 8
    $region25: #{tpu_custom_call.1} parent=1 // pred_fallthru
      _
    // Predicated region
    $region26: #{tpu_custom_call.1} parent=1 // pred_check
      _
    $region27: #{tpu_custom_call.1} parent=1 // pred_check_branch
      %87 = sbr.rel (0) target = $region29
    $region28: #{tpu_custom_call.1} parent=1 // pred_region
      %89 = dma.done [#allocation3], 512
    $region29: #{tpu_custom_call.1} parent=1 // pred_fallthru
      _
    // Predicated region
    $region30: #{tpu_custom_call.1} parent=1 // pred_check
      _
    $region31: #{tpu_custom_call.1} parent=1 // pred_check_branch
      %91 = sbr.rel (0) target = $region33
    $region32: #{tpu_custom_call.1} parent=1 // pred_region
      %93 = dma.done [#allocation6], 512
    $region33: #{tpu_custom_call.1} parent=1 // pred_fallthru
      _
    // Predicated region
    $region34: #{tpu_custom_call.1} parent=1 // pred_check
      _
    $region35: #{tpu_custom_call.1} parent=1 // pred_check_branch
      %95 = sbr.rel (0) target = $region37
    $region36: #{tpu_custom_call.1} parent=1 // pred_region
      %97 = dma.done [#allocation6], 512
    $region37: #{tpu_custom_call.1} parent=1 // pred_fallthru
      _
    // Predicated region
    $region38: #{tpu_custom_call.1} parent=1 // pred_check
      _
    $region39: #{tpu_custom_call.1} parent=1 // pred_check_branch
      %99 = sbr.rel (0) target = $region41
    $region40: #{tpu_custom_call.1} parent=1 // pred_region
      %101 = dma.done [#allocation9], 512
    $region41: #{tpu_custom_call.1} parent=1 // pred_fallthru
      _
    // Predicated region
    $region42: #{tpu_custom_call.1} parent=1 // pred_check
      _
    $region43: #{tpu_custom_call.1} parent=1 // pred_check_branch
      %103 = sbr.rel (0) target = $region45
    $region44: #{tpu_custom_call.1} parent=1 // pred_region
      %105 = dma.done [#allocation9], 512
    $region45: #{tpu_custom_call.1} parent=1 // pred_fallthru
      _
    %v106 = vld [vmem:[#allocation2] sm:$0xff]
    %v107 = vld [vmem:[#allocation2 + $0x8] sm:$0xff]
    %v108 = vld [vmem:[#allocation2 + $0x10] sm:$0xff]
    %v109 = vld [vmem:[#allocation2 + $0x18] sm:$0xff]
    %v110 = vmul.f32 %v106, 1.442695
    %v111 = vpow.pop %v110
    %v112 = vmul.f32 %v107, 1.442695
    %v113 = vpow.pop %v112
    %v114 = vmul.f32 %v108, 1.442695
    %v115 = vpow.pop %v114
    %v116 = vmul.f32 %v109, 1.442695
    %v117 = vpow.pop %v116
    %118 = vxpose.xlu0.b32.start [1/16] %v111, 128
    %119 = vxpose.xlu0.b32.cont [2/16] %v113, 128
    %120 = vxpose.xlu0.b32.cont [3/16] %v115, 128
    %121 = vxpose.xlu0.b32.cont [4/16] %v117, 128
    %122 = vxpose.xlu0.b32.cont [5/16] 0.0, 128
    %123 = vxpose.xlu0.b32.cont [6/16] 0.0, 128
    %124 = vxpose.xlu0.b32.cont [7/16] 0.0, 128
    %125 = vxpose.xlu0.b32.cont [8/16] 0.0, 128
    %126 = vxpose.xlu0.b32.cont [9/16] 0.0, 128
    %127 = vxpose.xlu0.b32.cont [10/16] 0.0, 128
    %128 = vxpose.xlu0.b32.cont [11/16] 0.0, 128
    %129 = vxpose.xlu0.b32.cont [12/16] 0.0, 128
    %130 = vxpose.xlu0.b32.cont [13/16] 0.0, 128
    %131 = vxpose.xlu0.b32.cont [14/16] 0.0, 128
    %132 = vxpose.xlu0.b32.cont [15/16] 0.0, 128
    %133 = vxpose.xlu0.b32.end [16/16] 0.0, 128
    %v134 = vpop.trf.xlu0
    %v135 = vpop.trf.xlu0
    %v136 = vpop.trf.xlu0
    %v137 = vpop.trf.xlu0
    %v138 = vpop.trf.xlu0
    %v139 = vpop.trf.xlu0
    %v140 = vpop.trf.xlu0
    %v141 = vpop.trf.xlu0
    %v142 = vpop.trf.xlu0
    %v143 = vpop.trf.xlu0
    %v144 = vpop.trf.xlu0
    %v145 = vpop.trf.xlu0
    %v146 = vpop.trf.xlu0
    %v147 = vpop.trf.xlu0
    %v148 = vpop.trf.xlu0
    %v149 = vpop.trf.xlu0
    %v150 = vadd.f32 %v111, %v134
    %v151 = vadd.f32 %v113, %v135
    %v152 = vadd.f32 %v115, %v136
    %v153 = vadd.f32 %v117, %v137
    %v154 = vld [vmem:[%s2] sm:$0x1]
    %v156 = vperm.slane %v154, 0
    %v158 = vmul.f32 %v150, %v156
    %v159 = vmul.f32 %v151, %v156
    %v160 = vmul.f32 %v152, %v156
    %v161 = vmul.f32 %v153, %v156
    %vm162 = vcmask 261120
    %v163 = vsel %vm162, %v158, 0.0
    %164 = vadd.xlane.f32.xlu0 %v163
    %v165 = vpop.xlane.xlu0 %164
    %v166 = vsel %vm162, %v159, 0.0
    %167 = vadd.xlane.f32.xlu0 %v166
    %v168 = vpop.xlane.xlu0 %167
    %v169 = vsel %vm162, %v160, 0.0
    %170 = vadd.xlane.f32.xlu0 %v169
    %v171 = vpop.xlane.xlu0 %170
    %v172 = vsel %vm162, %v161, 0.0
    %173 = vadd.xlane.f32.xlu0 %v172
    %v174 = vpop.xlane.xlu0 %173
    %v175 = vand.u32 2147483647, %v165
    %v176 = vand.u32 2147483647, %v168
    %v177 = vand.u32 2147483647, %v171
    %v178 = vand.u32 2147483647, %v174
    %v179 = vmax.f32 %v175, %v176
    %v180 = vmax.f32 %v177, %v178
    %v181 = vmax.f32 %v179, %v180
    %v182 = vrot.slane %v181, 4
    %v183 = vmax.f32 %v181, %v182
    %v184 = vrot.slane %v183, 2
    %v185 = vmax.f32 %v183, %v184
    %v186 = vrot.slane %v185, 1
    %v187 = vmax.f32 %v185, %v186
    %s188 = vtos %v187
    %v189 = vstv %s188
    %v190 = vrcp.pop %v189
    %v191 = vmul.f32 %v189, %v190
    %v192 = vsub.f32 1.0, %v191
    %v193 = vmul.f32 %v190, %v192
    %v194 = vadd.f32 %v190, %v193
    %vm195 = vweird.f32 %v189
    %vm196 = vweird.f32 %v190
    %vm197 = vmor %vm195, %vm196
    %v198 = vsel %vm197, %v190, %v194
    %v199 = vand.u32 2147483647, %v189
    %vm200 = vcmp.eq.f32.partialorder %v199, 8.507059e+37
    %v201 = vand.u32 %v189, 2147483648
    %v202 = vor.u32 1.1754944e-38, %v201
    %v203 = vsel %vm200, %v202, %v198
    %s204 = vtos %v203
    %v205 = vstv %s204
    %v206 = vmul.f32 %v150, %v205
    %v207 = vmul.f32 %v151, %v205
    %v208 = vmul.f32 %v152, %v205
    %v209 = vmul.f32 %v153, %v205
    %v210 = vmul.f32 %v165, %v205
    %v211 = vmul.f32 %v168, %v205
    %v212 = vmul.f32 %v171, %v205
    %v213 = vmul.f32 %v174, %v205
    %v214 = vlaneseq
    %v215 = vshrl.u32 %v214, 7
    %v216 = vadd.s32 %v215, 8
    %v217 = vadd.s32 %v215, 16
    %v218 = vadd.s32 %v215, 24
    %v219 = vlaneseq
    %v220 = vand.u32 %v219, 127
    %v221 = vsub.f32 1.0, %v210
    %v222 = vsub.f32 1.0, %v211
    %v223 = vsub.f32 1.0, %v212
    %v224 = vsub.f32 1.0, %v213
    %v225 = vrcp.pop %v156
    %v226 = vmul.f32 %v156, %v225
    %v227 = vsub.f32 1.0, %v226
    %v228 = vmul.f32 %v225, %v227
    %v229 = vadd.f32 %v225, %v228
    %vm230 = vweird.f32 %v156
    %vm231 = vweird.f32 %v225
    %vm232 = vmor %vm230, %vm231
    %v233 = vsel %vm232, %v225, %v229
    %v234 = vand.u32 2147483647, %v156
    %vm235 = vcmp.eq.f32.partialorder %v234, 8.507059e+37
    %v236 = vand.u32 %v156, 2147483648
    %v237 = vor.u32 1.1754944e-38, %v236
    %v238 = vsel %vm235, %v237, %v233
    %v239 = vmul.f32 %v221, %v238
    %v240 = vmul.f32 %v222, %v238
    %v241 = vmul.f32 %v223, %v238
    %v242 = vmul.f32 %v224, %v238
    %vm243 = vcmp.eq.s32.totalorder %v215, %v220
    %vm244 = vcmp.eq.s32.totalorder %v216, %v220
    %vm245 = vcmp.eq.s32.totalorder %v217, %v220
    %vm246 = vcmp.eq.s32.totalorder %v218, %v220
    %v247 = vsel %vm243, %v239, 0.0
    %v248 = vsel %vm244, %v240, 0.0
    %v249 = vsel %vm245, %v241, 0.0
    %v250 = vsel %vm246, %v242, 0.0
    %v251 = vadd.f32 %v206, %v247
    %v252 = vadd.f32 %v207, %v248
    %v253 = vadd.f32 %v208, %v249
    %v254 = vadd.f32 %v209, %v250
    %255 = vst.msk [vmem:[#allocation14] sm:$0xff] %vm162, %v251
    %256 = vst.msk [vmem:[#allocation14 + $0x8] sm:$0xff] %vm162, %v252
    %257 = vst.msk [vmem:[#allocation14 + $0x10] sm:$0xff] %vm162, %v253
    %258 = vst.msk [vmem:[#allocation14 + $0x18] sm:$0xff] %vm162, %v254
    %v259 = vld [vmem:[#allocation5] sm:$0xff]
    %v260 = vld [vmem:[#allocation5 + $0x8] sm:$0xff]
    %v261 = vld [vmem:[#allocation5 + $0x10] sm:$0xff]
    %v262 = vld [vmem:[#allocation5 + $0x18] sm:$0xff]
    %v264 = vsel %vm162, %v251, 0
    %v267 = vsel %vm162, %v252, 0
    %v270 = vsel %vm162, %v253, 0
    %v273 = vsel %vm162, %v254, 0
    %275 = vmatpush.msra.mxu0 0.0
    %276 = vmatpush.msra.mxu0 0.0
    %277 = vmatpush.msra.mxu0 0.0
    %278 = vmatpush.msra.mxu0 0.0
    %279 = vmatpush.msra.mxu0 0.0
    %280 = vmatpush.msra.mxu0 0.0
    %281 = vmatpush.msra.mxu0 0.0
    %282 = vmatpush.msra.mxu0 0.0
    %283 = vmatpush.msra.mxu0 0.0
    %284 = vmatpush.msra.mxu0 0.0
    %285 = vmatpush.msra.mxu0 0.0
    %286 = vmatpush.msra.mxu0 0.0
    %287 = vmatpush.msra.mxu0 %v262
    %288 = vmatpush.msra.mxu0 %v261
    %289 = vmatpush.msra.mxu0 %v260
    %290 = vmatpush.msra.mxu0 %v259
    %291 = vmatmul.f32.gmra.mxu0 %v264
    %v292 = vpop.f32.mrf.mxu0
    %v293 = vadd.f32 0.0, %v292
    %294 = vmatmul.f32.gmra.mxu0 %v267
    %v295 = vpop.f32.mrf.mxu0
    %v296 = vadd.f32 0.0, %v295
    %297 = vmatmul.f32.gmra.mxu0 %v270
    %v298 = vpop.f32.mrf.mxu0
    %v299 = vadd.f32 0.0, %v298
    %300 = vmatmul.f32.gmra.mxu0 %v273
    %v301 = vpop.f32.mrf.mxu0
    %v302 = vadd.f32 0.0, %v301
    %303 = vdwg.mxu0
    %304 = vst.msk [vmem:[#allocation12] sm:$0xff] %vm162, %v293
    %305 = vst.msk [vmem:[#allocation12 + $0x8] sm:$0xff] %vm162, %v296
    %306 = vst.msk [vmem:[#allocation12 + $0x10] sm:$0xff] %vm162, %v299
    %307 = vst.msk [vmem:[#allocation12 + $0x18] sm:$0xff] %vm162, %v302
    %v308 = vld [vmem:[#allocation8] sm:$0xff]
    %v309 = vld [vmem:[#allocation8 + $0x8] sm:$0xff]
    %v310 = vld [vmem:[#allocation8 + $0x10] sm:$0xff]
    %v311 = vld [vmem:[#allocation8 + $0x18] sm:$0xff]
    %312 = vxpose.xlu0.b32.start [1/16] %v251, 128
    %313 = vxpose.xlu0.b32.cont [2/16] %v252, 128
    %314 = vxpose.xlu0.b32.cont [3/16] %v253, 128
    %315 = vxpose.xlu0.b32.cont [4/16] %v254, 128
    %316 = vxpose.xlu0.b32.cont [5/16] 0.0, 128
    %317 = vxpose.xlu0.b32.cont [6/16] 0.0, 128
    %318 = vxpose.xlu0.b32.cont [7/16] 0.0, 128
    %319 = vxpose.xlu0.b32.cont [8/16] 0.0, 128
    %320 = vxpose.xlu0.b32.cont [9/16] 0.0, 128
    %321 = vxpose.xlu0.b32.cont [10/16] 0.0, 128
    %322 = vxpose.xlu0.b32.cont [11/16] 0.0, 128
    %323 = vxpose.xlu0.b32.cont [12/16] 0.0, 128
    %324 = vxpose.xlu0.b32.cont [13/16] 0.0, 128
    %325 = vxpose.xlu0.b32.cont [14/16] 0.0, 128
    %326 = vxpose.xlu0.b32.cont [15/16] 0.0, 128
    %327 = vxpose.xlu0.b32.end [16/16] 0.0, 128
    %v328 = vpop.trf.xlu0
    %v329 = vpop.trf.xlu0
    %v330 = vpop.trf.xlu0
    %v331 = vpop.trf.xlu0
    %v332 = vpop.trf.xlu0
    %v333 = vpop.trf.xlu0
    %v334 = vpop.trf.xlu0
    %v335 = vpop.trf.xlu0
    %v336 = vpop.trf.xlu0
    %v337 = vpop.trf.xlu0
    %v338 = vpop.trf.xlu0
    %v339 = vpop.trf.xlu0
    %v340 = vpop.trf.xlu0
    %v341 = vpop.trf.xlu0
    %v342 = vpop.trf.xlu0
    %v343 = vpop.trf.xlu0
    %v345 = vsel %vm162, %v328, 0
    %v348 = vsel %vm162, %v329, 0
    %v351 = vsel %vm162, %v330, 0
    %v354 = vsel %vm162, %v331, 0
    %356 = vmatpush.msra.mxu0 0.0
    %357 = vmatpush.msra.mxu0 0.0
    %358 = vmatpush.msra.mxu0 0.0
    %359 = vmatpush.msra.mxu0 0.0
    %360 = vmatpush.msra.mxu0 0.0
    %361 = vmatpush.msra.mxu0 0.0
    %362 = vmatpush.msra.mxu0 0.0
    %363 = vmatpush.msra.mxu0 0.0
    %364 = vmatpush.msra.mxu0 0.0
    %365 = vmatpush.msra.mxu0 0.0
    %366 = vmatpush.msra.mxu0 0.0
    %367 = vmatpush.msra.mxu0 0.0
    %368 = vmatpush.msra.mxu0 %v311
    %369 = vmatpush.msra.mxu0 %v310
    %370 = vmatpush.msra.mxu0 %v309
    %371 = vmatpush.msra.mxu0 %v308
    %372 = vmatmul.f32.gmra.mxu0 %v345
    %v373 = vpop.f32.mrf.mxu0
    %v374 = vadd.f32 0.0, %v373
    %375 = vmatmul.f32.gmra.mxu0 %v348
    %v376 = vpop.f32.mrf.mxu0
    %v377 = vadd.f32 0.0, %v376
    %378 = vmatmul.f32.gmra.mxu0 %v351
    %v379 = vpop.f32.mrf.mxu0
    %v380 = vadd.f32 0.0, %v379
    %381 = vmatmul.f32.gmra.mxu0 %v354
    %v382 = vpop.f32.mrf.mxu0
    %v383 = vadd.f32 0.0, %v382
    %384 = vdwg.mxu0
    %v385 = vld [vmem:[#allocation7] sm:$0xff]
    %v386 = vld [vmem:[#allocation7 + $0x8] sm:$0xff]
    %v387 = vld [vmem:[#allocation7 + $0x10] sm:$0xff]
    %v388 = vld [vmem:[#allocation7 + $0x18] sm:$0xff]
    %389 = vmatpush.msra.mxu0 0.0
    %390 = vmatpush.msra.mxu0 0.0
    %391 = vmatpush.msra.mxu0 0.0
    %392 = vmatpush.msra.mxu0 0.0
    %393 = vmatpush.msra.mxu0 0.0
    %394 = vmatpush.msra.mxu0 0.0
    %395 = vmatpush.msra.mxu0 0.0
    %396 = vmatpush.msra.mxu0 0.0
    %397 = vmatpush.msra.mxu0 0.0
    %398 = vmatpush.msra.mxu0 0.0
    %399 = vmatpush.msra.mxu0 0.0
    %400 = vmatpush.msra.mxu0 0.0
    %401 = vmatpush.msra.mxu0 %v388
    %402 = vmatpush.msra.mxu0 %v387
    %403 = vmatpush.msra.mxu0 %v386
    %404 = vmatpush.msra.mxu0 %v385
    %405 = vmatmul.f32.gmra.mxu0 %v345
    %v406 = vpop.f32.mrf.mxu0
    %v407 = vadd.f32 0.0, %v406
    %408 = vmatmul.f32.gmra.mxu0 %v348
    %v409 = vpop.f32.mrf.mxu0
    %v410 = vadd.f32 0.0, %v409
    %411 = vmatmul.f32.gmra.mxu0 %v351
    %v412 = vpop.f32.mrf.mxu0
    %v413 = vadd.f32 0.0, %v412
    %414 = vmatmul.f32.gmra.mxu0 %v354
    %v415 = vpop.f32.mrf.mxu0
    %v416 = vadd.f32 0.0, %v415
    %417 = vdwg.mxu0
    %v419 = vsel %vm162, %v407, 0
    %v422 = vsel %vm162, %v410, 0
    %v425 = vsel %vm162, %v413, 0
    %v428 = vsel %vm162, %v416, 0
    %430 = vmatpush.msra.mxu0 0.0
    %431 = vmatpush.msra.mxu0 0.0
    %432 = vmatpush.msra.mxu0 0.0
    %433 = vmatpush.msra.mxu0 0.0
    %434 = vmatpush.msra.mxu0 0.0
    %435 = vmatpush.msra.mxu0 0.0
    %436 = vmatpush.msra.mxu0 0.0
    %437 = vmatpush.msra.mxu0 0.0
    %438 = vmatpush.msra.mxu0 0.0
    %439 = vmatpush.msra.mxu0 0.0
    %440 = vmatpush.msra.mxu0 0.0
    %441 = vmatpush.msra.mxu0 0.0
    %442 = vmatpush.msra.mxu0 %v254
    %443 = vmatpush.msra.mxu0 %v253
    %444 = vmatpush.msra.mxu0 %v252
    %445 = vmatpush.msra.mxu0 %v251
    %446 = vmatmul.f32.gmra.mxu0 %v419
    %v447 = vpop.f32.mrf.mxu0
    %v448 = vadd.f32 0.0, %v447
    %449 = vmatmul.f32.gmra.mxu0 %v422
    %v450 = vpop.f32.mrf.mxu0
    %v451 = vadd.f32 0.0, %v450
    %452 = vmatmul.f32.gmra.mxu0 %v425
    %v453 = vpop.f32.mrf.mxu0
    %v454 = vadd.f32 0.0, %v453
    %455 = vmatmul.f32.gmra.mxu0 %v428
    %v456 = vpop.f32.mrf.mxu0
    %v457 = vadd.f32 0.0, %v456
    %458 = vdwg.mxu0
    %v459 = vld [vmem:[#allocation10] sm:$0xff]
    %v460 = vld [vmem:[#allocation10 + $0x8] sm:$0xff]
    %v461 = vld [vmem:[#allocation10 + $0x10] sm:$0xff]
    %v462 = vld [vmem:[#allocation10 + $0x18] sm:$0xff]
    %v464 = vsel %vm162, %v448, 0
    %v467 = vsel %vm162, %v451, 0
    %v470 = vsel %vm162, %v454, 0
    %v473 = vsel %vm162, %v457, 0
    %475 = vmatpush.msra.mxu0 0.0
    %476 = vmatpush.msra.mxu0 0.0
    %477 = vmatpush.msra.mxu0 0.0
    %478 = vmatpush.msra.mxu0 0.0
    %479 = vmatpush.msra.mxu0 0.0
    %480 = vmatpush.msra.mxu0 0.0
    %481 = vmatpush.msra.mxu0 0.0
    %482 = vmatpush.msra.mxu0 0.0
    %483 = vmatpush.msra.mxu0 0.0
    %484 = vmatpush.msra.mxu0 0.0
    %485 = vmatpush.msra.mxu0 0.0
    %486 = vmatpush.msra.mxu0 0.0
    %487 = vmatpush.msra.mxu0 %v462
    %488 = vmatpush.msra.mxu0 %v461
    %489 = vmatpush.msra.mxu0 %v460
    %490 = vmatpush.msra.mxu0 %v459
    %491 = vmatmul.f32.gmra.mxu0 %v464
    %v492 = vpop.f32.mrf.mxu0
    %v493 = vadd.f32 0.0, %v492
    %494 = vmatmul.f32.gmra.mxu0 %v467
    %v495 = vpop.f32.mrf.mxu0
    %v496 = vadd.f32 0.0, %v495
    %497 = vmatmul.f32.gmra.mxu0 %v470
    %v498 = vpop.f32.mrf.mxu0
    %v499 = vadd.f32 0.0, %v498
    %500 = vmatmul.f32.gmra.mxu0 %v473
    %v501 = vpop.f32.mrf.mxu0
    %v502 = vadd.f32 0.0, %v501
    %503 = vdwg.mxu0
    %v504 = vmul.f32 %v374, 2.0
    %v505 = vmul.f32 %v377, 2.0
    %v506 = vmul.f32 %v380, 2.0
    %v507 = vmul.f32 %v383, 2.0
    %v508 = vsub.f32 %v493, %v504
    %v509 = vsub.f32 %v496, %v505
    %v510 = vsub.f32 %v499, %v506
    %v511 = vsub.f32 %v502, %v507
    %512 = vst.msk [vmem:[#allocation11] sm:$0xff] %vm162, %v508
    %513 = vst.msk [vmem:[#allocation11 + $0x8] sm:$0xff] %vm162, %v509
    %514 = vst.msk [vmem:[#allocation11 + $0x10] sm:$0xff] %vm162, %v510
    %515 = vst.msk [vmem:[#allocation11 + $0x18] sm:$0xff] %vm162, %v511
    // Predicated region
    $region46: #{tpu_custom_call.1} parent=1 // pred_check
      _
    $region47: #{tpu_custom_call.1} parent=1 // pred_check_branch
      %517 = sbr.rel (0) target = $region49
    $region48: #{tpu_custom_call.1} parent=1 // pred_region
      %519 = vsyncadd [#allocation4], 0
      %s520 = sshll.u32 [#allocation11], 4
      %s521 = int_to_ptr.vmem [resolvable:$true] %s520
      %s522 = sshll.u32 %s6, 4
      %s523 = int_to_ptr.hbm [resolvable:$true] %s522
      %528 = dma.vmem_to_hbm [thread:$0]  %s521, 512, %s523, [#allocation4], 128, 128, 8
    $region49: #{tpu_custom_call.1} parent=1 // pred_fallthru
      _
    // Predicated region
    $region50: #{tpu_custom_call.1} parent=1 // pred_check
      _
    $region51: #{tpu_custom_call.1} parent=1 // pred_check_branch
      %530 = sbr.rel (0) target = $region53
    $region52: #{tpu_custom_call.1} parent=1 // pred_region
      %532 = vsyncadd [#allocation13], 0
      %s533 = sshll.u32 [#allocation12], 4
      %s534 = int_to_ptr.vmem [resolvable:$true] %s533
      %s535 = sshll.u32 %s7, 4
      %s536 = int_to_ptr.hbm [resolvable:$true] %s535
      %541 = dma.vmem_to_hbm [thread:$0]  %s534, 512, %s536, [#allocation13], 128, 128, 8
    $region53: #{tpu_custom_call.1} parent=1 // pred_fallthru
      _
    // Predicated region
    $region54: #{tpu_custom_call.1} parent=1 // pred_check
      _
    $region55: #{tpu_custom_call.1} parent=1 // pred_check_branch
      %543 = sbr.rel (0) target = $region57
    $region56: #{tpu_custom_call.1} parent=1 // pred_region
      %545 = vsyncadd [#allocation13], 0
      %s546 = sshll.u32 [#allocation14], 4
      %s547 = int_to_ptr.vmem [resolvable:$true] %s546
      %s548 = sshll.u32 %s8, 4
      %s549 = int_to_ptr.hbm [resolvable:$true] %s548
      %554 = dma.vmem_to_hbm [thread:$0]  %s547, 512, %s549, [#allocation13], 128, 128, 8
    $region57: #{tpu_custom_call.1} parent=1 // pred_fallthru
      _
    // Predicated region
    $region58: #{tpu_custom_call.1} parent=1 // pred_check
      _
    $region59: #{tpu_custom_call.1} parent=1 // pred_check_branch
      %556 = sbr.rel (0) target = $region61
    $region60: #{tpu_custom_call.1} parent=1 // pred_region
      %558 = dma.done [#allocation4], 512
    $region61: #{tpu_custom_call.1} parent=1 // pred_fallthru
      _
    // Predicated region
    $region62: #{tpu_custom_call.1} parent=1 // pred_check
      _
    $region63: #{tpu_custom_call.1} parent=1 // pred_check_branch
      %560 = sbr.rel (0) target = $region65
    $region64: #{tpu_custom_call.1} parent=1 // pred_region
      %562 = dma.done [#allocation13], 512
    $region65: #{tpu_custom_call.1} parent=1 // pred_fallthru
      _
    // Predicated region
    $region66: #{tpu_custom_call.1} parent=1 // pred_check
      _
    $region67: #{tpu_custom_call.1} parent=1 // pred_check_branch
      %564 = sbr.rel (0) target = $region69
    $region68: #{tpu_custom_call.1} parent=1 // pred_region
      %566 = dma.done [#allocation13], 512
    $region69: #{tpu_custom_call.1} parent=1 // pred_fallthru
      _
    %567 = vsyncpa [#allocation3], 1
    %568 = vsyncpa [#allocation6], 1
    %569 = vsyncpa [#allocation9], 1
    %570 = vsyncpa [#allocation4], 1
    %571 = vsyncpa [#allocation13], 1

</llo_original>
